<compile_context>
chip_gen: v7x
topology: tpu7x:2x2x1
jax: 0.10.0
libtpu: 0.0.40
codegen_flags: <defaults>
</compile_context>

<pallas_src>
import math
from functools import partial

import jax
import jax.numpy as jnp
from jax.experimental import pallas as pl
from jax.experimental.pallas import tpu as pltpu


def _conv_kernel(x_ref, w_ref, o_ref):
    """One (tm, tn) output tile: a single K = 3*c_in MXU matmul.

    x_ref: (tm, 3*c_in)  concatenated [x_prev | x_curr | x_next] rows.
    w_ref: (3*c_in, tn)  concatenated weight taps (lane-dense, padded to 128).
    o_ref: (tm, tn)      lane-dense output tile.
    """
    o_ref[...] = jnp.dot(
        x_ref[...], w_ref[...], preferred_element_type=jnp.float32
    ).astype(o_ref.dtype)


def _round_up(a, b):
    return ((a + b - 1) // b) * b


@partial(jax.jit, static_argnames=("tm", "out_dtype"))
def token_embedding_forward(x, weight, *, tm=1024, out_dtype=None):
    """x: (B, L, c_in) float32.  weight: (d_model, c_in, 3) (PyTorch Conv1d layout).
    Returns (B, L, d_model) in out_dtype (defaults to x.dtype)."""
    B, L, c_in = x.shape
    d_model = weight.shape[0]
    M = B * L
    K = 3 * c_in
    out_dtype = x.dtype if out_dtype is None else out_dtype

    # --- fused weight: (d_model, c_in, 3) -> (3, c_in, d_model) -> (3*c_in, d_model).
    #     tap k (row block k*c_in:(k+1)*c_in) multiplies x shifted by (k - 1). ---
    w_cat = jnp.transpose(weight, (2, 1, 0)).reshape(K, d_model)

    # --- lane-dense N tiling: pad d_model up to 128; for very wide d_model pad up to
    #     a multiple of tn=512 so tiles never degrade to 128 wide (sliced off after). ---
    N_pad = _round_up(d_model, 128)
    if N_pad <= 1024:
        tn = N_pad
    else:
        tn = 512
        N_pad = _round_up(N_pad, tn)
    if N_pad != d_model:
        w_cat = jnp.pad(w_cat, ((0, 0), (0, N_pad - d_model)))

    # --- M tiling: big row tiles, padded-M grid (no divisibility assert) ---
    tm_eff = min(_round_up(tm, 8), _round_up(M, 8))
    M_pad = _round_up(M, tm_eff)

    # --- v7x megacore: make sure at least one "parallel" axis has >= 2 iterations ---
    if (M_pad // tm_eff) * (N_pad // tn) == 1:
        if M >= 16:
            tm_eff = _round_up(-(-M // 2), 8)   # ceil(M/2) rounded to sublane multiple
            M_pad = _round_up(M, tm_eff)
        elif N_pad % 256 == 0:
            tn = N_pad // 2

    # --- fused input: circular shifts along L (per batch, so batches never mix),
    #     concatenated along channels, flattened to rows, padded to M_pad.
    #     All of this fuses into a single pre-kernel pass under jit. ---
    x_prev = jnp.roll(x, 1, axis=1)      # x[b, (l-1) % L, :]
    x_next = jnp.roll(x, -1, axis=1)     # x[b, (l+1) % L, :]
    x_cat = jnp.concatenate([x_prev, x, x_next], axis=-1).reshape(M, K)
    if M_pad != M:
        x_cat = jnp.pad(x_cat, ((0, M_pad - M), (0, 0)))   # zero rows -> sliced off

    grid_m = M_pad // tm_eff
    grid_n = N_pad // tn
    grid = (grid_m, grid_n)

    x_spec = pl.BlockSpec((tm_eff, K), lambda i, j: (i, 0))
    w_spec = pl.BlockSpec((K, tn), lambda i, j: (0, j))
    o_spec = pl.BlockSpec((tm_eff, tn), lambda i, j: (i, j))

    out_itemsize = jnp.dtype(out_dtype).itemsize
    cost = pl.CostEstimate(
        flops=2 * M * K * d_model,
        transcendentals=0,
        bytes_accessed=(
            4 * M_pad * K * grid_n           # x block re-fetched per N-tile
            + 4 * K * N_pad * grid_m         # weight block re-fetched per M-tile
            + out_itemsize * M_pad * N_pad   # output written once
        ),
    )

    out2d = pl.pallas_call(
        _conv_kernel,
        out_shape=jax.ShapeDtypeStruct((M_pad, N_pad), out_dtype),
        grid_spec=pltpu.PrefetchScalarGridSpec(
            num_scalar_prefetch=0,
            grid=grid,
            in_specs=[x_spec, w_spec],
            out_specs=o_spec,
        ),
        compiler_params=pltpu.CompilerParams(
            dimension_semantics=("parallel", "parallel"),
            # 32 MiB is safe on every generation (v7x physical VMEM is 64 MiB);
            # tiles here use < 10 MiB double-buffered, so no need to raise it.
            vmem_limit_bytes=32 * 1024 * 1024,
        ),
        cost_estimate=cost,
    )(x_cat, w_cat)

    return out2d[:M, :d_model].reshape(B, L, d_model)


def init_weight(key, c_in, d_model):
    """Deterministic kaiming_normal_(mode='fan_in', nonlinearity='leaky_relu')
    for a Conv1d weight of shape (d_model, c_in, 3)."""
    fan_in = c_in * 3
    a = 0.0  # PyTorch's default negative_slope argument of kaiming_normal_
    gain = math.sqrt(2.0 / (1.0 + a * a))
    std = gain / math.sqrt(fan_in)
    return std * jax.random.normal(key, (d_model, c_in, 3), dtype=jnp.float32)


def _reference(x, weight):
    """Pure-JAX reference of the circular conv (channels-last)."""
    shifts = [jnp.roll(x, 1, axis=1), x, jnp.roll(x, -1, axis=1)]
    out = jnp.zeros((x.shape[0], x.shape[1], weight.shape[0]), dtype=jnp.float32)
    for k in range(3):
        out = out + jnp.einsum("blc,oc->blo", shifts[k], weight[:, :, k])
    return out


if __name__ == "__main__":
    key = jax.random.PRNGKey(0)

    # Small shape matching the module spec (B=2, L=8, c_in=4, d_model=32).
    # Exercises the ">= 2 parallel tiles" M-split path (M=16 -> two 8-row tiles).
    B, L, c_in, d_model = 2, 8, 4, 32
    kx, kw, kx2, kw2 = jax.random.split(key, 4)
    x = jax.random.normal(kx, (B, L, c_in), dtype=jnp.float32)
    weight = init_weight(kw, c_in, d_model)
    out = jax.block_until_ready(token_embedding_forward(x, weight))
    ref = _reference(x, weight)
    assert out.shape == (B, L, d_model)
    assert jnp.allclose(out, ref, atol=1e-4, rtol=1e-4), "mismatch vs reference (small)"

    # Second shape exercising the M-padding and N-padding paths (still small/fast).
    B2, L2, c2, d2 = 5, 30, 7, 200
    x2 = jax.random.normal(kx2, (B2, L2, c2), dtype=jnp.float32)
    w2 = init_weight(kw2, c2, d2)
    out2 = jax.block_until_ready(token_embedding_forward(x2, w2))
    ref2 = _reference(x2, w2)
    assert out2.shape == (B2, L2, d2)
    assert jnp.allclose(out2, ref2, atol=1e-4, rtol=1e-4), "mismatch vs reference (padded)"

    print("KERNEL_OK")
</pallas_src>

<mosaic_0001>
module attributes {stable_mosaic.version = 11 : i64} {
  func.func @_conv_kernel(%arg0: i32, %arg1: i32, %arg2: memref<8x12xf32, #tpu.memory_space<vmem>>, %arg3: memref<12x128xf32, #tpu.memory_space<vmem>>, %arg4: memref<8x128xf32, #tpu.memory_space<vmem>>) attributes {dimension_semantics = [#tpu.dimension_semantics<parallel>, #tpu.dimension_semantics<parallel>], iteration_bounds = array<i64: 2, 1>, scalar_prefetch = 0 : i64, scratch_operands = 0 : i64, tpu.core_type = #tpu.core_type<tc>, window_params = [{transform_indices = @transform_0, window_bounds = array<i64: 8, 12>}, {transform_indices = @transform_1, window_bounds = array<i64: 12, 128>}, {transform_indices = @transform_2, window_bounds = array<i64: 8, 128>}]} {
    %c0 = arith.constant 0 : index
    %c0_0 = arith.constant 0 : index
    %0 = vector.load %arg2[%c0, %c0_0] : memref<8x12xf32, #tpu.memory_space<vmem>>, vector<8x12xf32>
    %c0_1 = arith.constant 0 : index
    %c0_2 = arith.constant 0 : index
    %1 = vector.load %arg3[%c0_1, %c0_2] : memref<12x128xf32, #tpu.memory_space<vmem>>, vector<12x128xf32>
    %cst = arith.constant dense<0.000000e+00> : vector<8x128xf32>
    %2 = tpu.matmul %0, %1, %cst {dimension_numbers = #tpu.dot_dimension_numbers<[1], [0], [0], [1], [0, 0, 1, 1], [], []>} : vector<8x12xf32>, vector<12x128xf32>, vector<8x128xf32> -> vector<8x128xf32>
    %c0_3 = arith.constant 0 : index
    %c0_4 = arith.constant 0 : index
    %3 = vector.load %arg4[%c0_3, %c0_4] : memref<8x128xf32, #tpu.memory_space<vmem>>, vector<8x128xf32>
    tpu.vector_store %arg4[%c0_3, %c0_4], %2 {strides = array<i32>} : memref<8x128xf32, #tpu.memory_space<vmem>>, vector<8x128xf32>,
    return
  }
  func.func @transform_0(%arg0: i32, %arg1: i32) -> (i32, i32) {
    %c0_i32 = arith.constant 0 : i32
    %c0_i32_0 = arith.constant 0 : i32
    return %arg0, %c0_i32 : i32, i32
  }
  func.func @transform_1(%arg0: i32, %arg1: i32) -> (i32, i32) {
    %c0_i32 = arith.constant 0 : i32
    %c0_i32_0 = arith.constant 0 : i32
    return %c0_i32, %arg1 : i32, i32
  }
  func.func @transform_2(%arg0: i32, %arg1: i32) -> (i32, i32) {
    %c0_i32 = arith.constant 0 : i32
    return %arg0, %arg1 : i32, i32
  }
}

</mosaic_0001>

<llo_original>
// kernel: token_embedding_forward.1
$region0: #{token_embedding_forward.1}
  #allocation0 [shape = 'u32[]', space=smem, size = 0x4, offset = 0x4, fixed_abs, tag = 'smem constant byte address 0x4 - core index']
  #allocation1 [shape = 'u32[144,128]{1,0:T(1,128)}', space=vmem, size = 0x12000, scoped, tag = 'internal scratch']
  %s0 = inlined_call_operand.vmem [shape: f32[16,12], index: 0, kind: input, shape index: {}]
  %s1 = inlined_call_operand.vmem [shape: f32[12,128], index: 1, kind: input, shape index: {}]
  %s2 = inlined_call_operand.vmem [shape: f32[16,128], index: 2, kind: output, shape index: {}]
  %s3 = sld [smem:[#allocation0]]
  $region41: #{token_embedding_forward.1} parent=0
    _
  %s5 = ssub.s32 1, %s3
  %s6 = scalar_select 0, %s5, %s3
  loop: start=0, step=1, limit=4
  $region2: #{token_embedding_forward.1} parent=0 // loop_pre_header
    _
  $region3: #{token_embedding_forward.1} parent=0 // loop_header
    %s8 = sphi 0, %s12
    %p9 = scmp.ge.s32.totalorder %s8, 4
    %s15 = sphi 0, %s27
    %s16 = sphi 0, %s23
    %s17 = sphi 0, %s15
    %s18 = sphi 0, %s16
    %s19 = sphi 0, %s17
    %s20 = sphi 0, %s18
    %s30 = sphi 0, %s32
    %s33 = sphi 0, %s30
    %s34 = sphi 0, %s33
    %s50 = sphi 0, %s34
    %s56 = sphi 0, %s58
    %s59 = sphi 0, %s56
    %s60 = sphi 0, %s59
    %s76 = sphi 0, %s60
    %s84 = sphi 0, %s86
    %s87 = sphi 0, %s84
    %s88 = sphi 0, %s87
    %s104 = sphi 0, %s88
  $region4: #{token_embedding_forward.1} parent=0 // loop_header_branch
    %11 = sbr.rel (%p9) target = $region8
  $region5: #{token_embedding_forward.1} parent=0 // loop_body
    %s13 = ssub.s32 %s8, 1
    %s14 = ssub.s32 %s8, 2
    %s21 = sadd.s32 1, %s16
    %p22 = scmp.ge.s32.totalorder %s21, 1
    %s23 = scalar_select %p22, 0, %s21
    %s24 = sadd.s32 1, %s15
    %s25 = scalar_select %p22, %s24, %s15
    %p26 = scmp.ge.s32.totalorder %s25, 2
    %s27 = scalar_select %p26, 0, %s25
    %s28 = ssub.s32 %s15, %s27
    %p29 = scmp.eq.s32.totalorder %s28, 0
    %s31 = sadd.s32 %s30, 1
    %s32 = scalar_select %p29, %s30, %s31
    %p35 = pneg %p29
    %p36 = scmp.eq.s32.totalorder %s8, 1
    %p37 = por %p35, %p36
    %p38 = scmp.ne.s32.totalorder %s30, %s33
    %p39 = scmp.eq.s32.totalorder %s8, 0
    %p40 = por %p38, %p39
    %p41 = scmp.ne.s32.totalorder %s30, %s33
    %p42 = scmp.eq.s32.totalorder %s13, 1
    %p43 = por %p41, %p42
    %p44 = scmp.ne.s32.totalorder %s33, %s34
    %p45 = scmp.eq.s32.totalorder %s13, 0
    %p46 = por %p44, %p45
    %p47 = scmp.ne.s32.totalorder %s33, %s34
    %p48 = scmp.eq.s32.totalorder %s14, 1
    %p49 = por %p47, %p48
    %p51 = scmp.ne.s32.totalorder %s34, %s50
    %p52 = scmp.eq.s32.totalorder %s14, 0
    %p53 = por %p51, %p52
    %s54 = ssub.s32 %s16, %s23
    %p55 = scmp.eq.s32.totalorder %s54, 0
    %s57 = sadd.s32 %s56, 1
    %s58 = scalar_select %p55, %s56, %s57
    %p61 = pneg %p55
    %p62 = scmp.eq.s32.totalorder %s8, 1
    %p63 = por %p61, %p62
    %p64 = scmp.ne.s32.totalorder %s56, %s59
    %p65 = scmp.eq.s32.totalorder %s8, 0
    %p66 = por %p64, %p65
    %p67 = scmp.ne.s32.totalorder %s56, %s59
    %p68 = scmp.eq.s32.totalorder %s13, 1
    %p69 = por %p67, %p68
    %p70 = scmp.ne.s32.totalorder %s59, %s60
    %p71 = scmp.eq.s32.totalorder %s13, 0
    %p72 = por %p70, %p71
    %p73 = scmp.ne.s32.totalorder %s59, %s60
    %p74 = scmp.eq.s32.totalorder %s14, 1
    %p75 = por %p73, %p74
    %p77 = scmp.ne.s32.totalorder %s60, %s76
    %p78 = scmp.eq.s32.totalorder %s14, 0
    %p79 = por %p77, %p78
    %s80 = ssub.s32 %s15, %s27
    %s81 = ssub.s32 %s16, %s23
    %s82 = sor.u32 %s80, %s81
    %p83 = scmp.eq.s32.totalorder %s82, 0
    %s85 = sadd.s32 %s84, 1
    %s86 = scalar_select %p83, %s84, %s85
    %p89 = pneg %p83
    %p90 = scmp.eq.s32.totalorder %s8, 1
    %p91 = por %p89, %p90
    %p92 = scmp.ne.s32.totalorder %s84, %s87
    %p93 = scmp.eq.s32.totalorder %s8, 0
    %p94 = por %p92, %p93
    %p95 = scmp.ne.s32.totalorder %s84, %s87
    %p96 = scmp.eq.s32.totalorder %s13, 1
    %p97 = por %p95, %p96
    %p98 = scmp.ne.s32.totalorder %s87, %s88
    %p99 = scmp.eq.s32.totalorder %s13, 0
    %p100 = por %p98, %p99
    %p101 = scmp.ne.s32.totalorder %s87, %s88
    %p102 = scmp.eq.s32.totalorder %s14, 1
    %p103 = por %p101, %p102
    %p105 = scmp.ne.s32.totalorder %s88, %s104
    %p106 = scmp.eq.s32.totalorder %s14, 0
    %p107 = por %p105, %p106
    %p108 = scmp.le.s32.totalorder 1, %s8
    %p109 = scmp.lt.s32.totalorder %s8, 3
    %p110 = pnand %p108, %p109
    %p111 = pneg %p110
    // Predicated region
    $region9: #{token_embedding_forward.1} parent=5 // pred_check
      _
    $region10: #{token_embedding_forward.1} parent=5 // pred_check_branch
      %113 = sbr.rel (%p110) target = $region12
    $region11: #{token_embedding_forward.1} parent=5 // pred_region
      %s114 = ssub.s32 %s8, 1
      // Predicated region
      $region13: #{token_embedding_forward.1} parent=11 // pred_check
        %p115 = pneg %p72
      $region14: #{token_embedding_forward.1} parent=11 // pred_check_branch
        %117 = sbr.rel (%p115) target = $region16
      $region15: #{token_embedding_forward.1} parent=11 // pred_region
        %p118 = scmp.lt.s32.totalorder %s18, 0
        %s119 = scalar_select %p118, %s18, 0
        %s120 = smul.addr %s119, 8
        %s121 = scalar_lea.vmem %s1, %s120
      $region16: #{token_embedding_forward.1} parent=11 // pred_fallthru
        _
    $region12: #{token_embedding_forward.1} parent=5 // pred_fallthru
      _
    %p122 = scmp.lt.s32.totalorder %s8, 2
    // Predicated region
    $region17: #{token_embedding_forward.1} parent=5 // pred_check
      %p123 = pneg %p122
    $region18: #{token_embedding_forward.1} parent=5 // pred_check_branch
      %125 = sbr.rel (%p123) target = $region20
    $region19: #{token_embedding_forward.1} parent=5 // pred_region
      // Predicated region
      $region21: #{token_embedding_forward.1} parent=19 // pred_check
        %p126 = pneg %p40
      $region22: #{token_embedding_forward.1} parent=19 // pred_check_branch
        %128 = sbr.rel (%p126) target = $region24
      $region23: #{token_embedding_forward.1} parent=19 // pred_region
        %p129 = scmp.lt.s32.totalorder %s15, 1
        %s130 = scalar_select %p129, %s15, 1
        %s131 = smul.addr %s130, 8
        %s132 = scalar_lea.vmem %s0, %s131
      $region24: #{token_embedding_forward.1} parent=19 // pred_fallthru
        _
    $region20: #{token_embedding_forward.1} parent=5 // pred_fallthru
      _
    %p133 = scmp.le.s32.totalorder 1, %s8
    %p134 = scmp.lt.s32.totalorder %s8, 3
    %p135 = pnand %p133, %p134
    %p136 = pneg %p135
    // Predicated region
    $region25: #{token_embedding_forward.1} parent=5 // pred_check
      _
    $region26: #{token_embedding_forward.1} parent=5 // pred_check_branch
      %138 = sbr.rel (%p135) target = $region28
    $region27: #{token_embedding_forward.1} parent=5 // pred_region
      %s139 = ssub.s32 %s8, 1
      %p140 = scmp.lt.s32.totalorder %s17, 1
      %s141 = scalar_select %p140, %s17, 1
      %s142 = smul.addr %s141, 8
      %s143 = scalar_lea.vmem %s0, %s142
      %p144 = pneg %p46
      %p145 = pneg %p43
      %p146 = scmp.lt.s32.totalorder %s18, 0
      %s147 = scalar_select %p146, %s18, 0
      %s148 = smul.addr %s147, 8
      %s149 = scalar_lea.vmem %s1, %s148
      %p150 = pneg %p72
      %p151 = pneg %p69
      %p152 = pneg %p100
      %p153 = pneg %p97
      %p154 = scmp.lt.s32.totalorder %s17, 1
      %s155 = scalar_select %p154, %s17, 1
      %p156 = scmp.lt.s32.totalorder %s18, 0
      %s157 = scalar_select %p156, %s18, 0
      %s158 = sadd.s32 %s157, %s155
      %s159 = smul.addr %s158, 8
      %s160 = scalar_lea.vmem %s2, %s159
      %p161 = scmp.lt.s32.totalorder %s17, 1
      %s162 = scalar_select %p161, %s17, 1
      %s163 = smul.addr %s162, 8
      %s164 = scalar_lea.vmem %s0, %s163
      %p165 = scmp.lt.s32.totalorder %s18, 0
      %s166 = scalar_select %p165, %s18, 0
      %s167 = smul.addr %s166, 8
      %s168 = scalar_lea.vmem %s1, %s167
      %p169 = scmp.lt.s32.totalorder %s17, 1
      %s170 = scalar_select %p169, %s17, 1
      %p171 = scmp.lt.s32.totalorder %s18, 0
      %s172 = scalar_select %p171, %s18, 0
      %s173 = sadd.s32 %s172, %s170
      %s174 = smul.addr %s173, 8
      %s175 = scalar_lea.vmem %s2, %s174
      %v176 = vld [vmem:[%s164] sm:$0xff]
      %v177 = vld [vmem:[%s168] sm:$0xff]
      %v178 = vld [vmem:[%s168 + $0x8] sm:$0xf]
      %vm179 = vcmask 97280
      %v181 = vsel %vm179, %v176, 0
      %vm183 = vcmask 1043456
      %v185 = vsel %vm183, %v178, 0
      %187 = vmatprep.subr.mxu0 0.0
      %188 = vmatpush1.msra.mxu0 %v177
      %189 = vmatprep.subr.mxu0 0.0
      %190 = vmatpush1.msra.mxu0 %v185
      %191 = vmatprep.subr.mxu0 0.0
      %192 = vmatpush1.msra.mxu0 0.0
      %193 = vmatprep.subr.mxu0 0.0
      %194 = vmatpush1.msra.mxu0 0.0
      %195 = vmatprep.subr.mxu0 0.0
      %196 = vmatpush1.msra.mxu0 0.0
      %197 = vmatprep.subr.mxu0 0.0
      %198 = vmatpush1.msra.mxu0 0.0
      %199 = vmatprep.subr.mxu0 0.0
      %200 = vmatpush1.msra.mxu0 0.0
      %201 = vmatprep.subr.mxu0 0.0
      %202 = vmatpush1.msra.mxu0 0.0
      %203 = vmatprep.subr.mxu0 0.0
      %204 = vmatpush1.msra.mxu0 0.0
      %205 = vmatprep.subr.mxu0 0.0
      %206 = vmatpush1.msra.mxu0 0.0
      %207 = vmatprep.subr.mxu0 0.0
      %208 = vmatpush1.msra.mxu0 0.0
      %209 = vmatprep.subr.mxu0 0.0
      %210 = vmatpush1.msra.mxu0 0.0
      %211 = vmatprep.subr.mxu0 0.0
      %212 = vmatpush1.msra.mxu0 0.0
      %213 = vmatprep.subr.mxu0 0.0
      %214 = vmatpush1.msra.mxu0 0.0
      %215 = vmatprep.subr.mxu0 0.0
      %216 = vmatpush1.msra.mxu0 0.0
      %217 = vmatprep.subr.mxu0 0.0
      %218 = vmatpush1.msra.mxu0 0.0
      %219 = vmatprep.subr.mxu0 0.0
      %220 = vmatpush1.msra.mxu0 0.0
      %221 = vmatprep.subr.mxu0 0.0
      %222 = vmatpush1.msra.mxu0 0.0
      %223 = vmatprep.subr.mxu0 0.0
      %224 = vmatpush1.msra.mxu0 0.0
      %225 = vmatprep.subr.mxu0 0.0
      %226 = vmatpush1.msra.mxu0 0.0
      %227 = vmatprep.subr.mxu0 0.0
      %228 = vmatpush1.msra.mxu0 0.0
      %229 = vmatprep.subr.mxu0 0.0
      %230 = vmatpush1.msra.mxu0 0.0
      %231 = vmatprep.subr.mxu0 0.0
      %232 = vmatpush1.msra.mxu0 0.0
      %233 = vmatprep.subr.mxu0 0.0
      %234 = vmatpush1.msra.mxu0 0.0
      %235 = vmatprep.subr.mxu0 0.0
      %236 = vmatpush1.msra.mxu0 0.0
      %237 = vmatprep.subr.mxu0 0.0
      %238 = vmatpush1.msra.mxu0 0.0
      %239 = vmatprep.subr.mxu0 0.0
      %240 = vmatpush1.msra.mxu0 0.0
      %241 = vmatprep.subr.mxu0 0.0
      %242 = vmatpush1.msra.mxu0 0.0
      %243 = vmatprep.subr.mxu0 0.0
      %244 = vmatpush1.msra.mxu0 0.0
      %245 = vmatprep.subr.mxu0 0.0
      %246 = vmatpush1.msra.mxu0 0.0
      %247 = vmatprep.subr.mxu0 0.0
      %248 = vmatpush1.msra.mxu0 0.0
      %249 = vmatprep.subr.mxu0 0.0
      %250 = vmatpush1.msra.mxu0 0.0
      %251 = vmatprep.mubr.f32.mxu0 0.0
      %252 = vmatmul.mubr.f32.gmra.mrb[0].mxu0 %v181
      %v253 = vpop.f32.mrb[0].mxu0
      %v254 = vadd.f32 0.0, %v253
      %v255 = vpop.f32.mrb[0].mxu0
      %256 = vdwg.mxu0
      %257 = vst [vmem:[%s175] sm:$0xff] %v254
      %p258 = scmp.lt.s32.totalorder %s17, 1
      %s259 = scalar_select %p258, %s17, 1
      %p260 = scmp.lt.s32.totalorder %s18, 0
      %s261 = scalar_select %p260, %s18, 0
      %s262 = sadd.s32 %s261, %s259
      %s263 = smul.addr %s262, 8
      %s264 = scalar_lea.vmem %s2, %s263
      // Predicated region
      $region29: #{token_embedding_forward.1} parent=27 // pred_check
        %p265 = pneg %p97
      $region30: #{token_embedding_forward.1} parent=27 // pred_check_branch
        %267 = sbr.rel (%p265) target = $region32
      $region31: #{token_embedding_forward.1} parent=27 // pred_region
        _
      $region32: #{token_embedding_forward.1} parent=27 // pred_fallthru
        _
    $region28: #{token_embedding_forward.1} parent=5 // pred_fallthru
      _
    %p268 = scmp.le.s32.totalorder 2, %s8
    // Predicated region
    $region33: #{token_embedding_forward.1} parent=5 // pred_check
      %p269 = pneg %p268
    $region34: #{token_embedding_forward.1} parent=5 // pred_check_branch
      %271 = sbr.rel (%p269) target = $region36
    $region35: #{token_embedding_forward.1} parent=5 // pred_region
      %s272 = ssub.s32 %s8, 2
      // Predicated region
      $region37: #{token_embedding_forward.1} parent=35 // pred_check
        %p273 = pneg %p103
      $region38: #{token_embedding_forward.1} parent=35 // pred_check_branch
        %275 = sbr.rel (%p273) target = $region40
      $region39: #{token_embedding_forward.1} parent=35 // pred_region
        %p276 = scmp.lt.s32.totalorder %s19, 1
        %s277 = scalar_select %p276, %s19, 1
        %p278 = scmp.lt.s32.totalorder %s20, 0
        %s279 = scalar_select %p278, %s20, 0
        %s280 = sadd.s32 %s279, %s277
        %s281 = smul.addr %s280, 8
        %s282 = scalar_lea.vmem %s2, %s281
      $region40: #{token_embedding_forward.1} parent=35 // pred_fallthru
        _
    $region36: #{token_embedding_forward.1} parent=5 // pred_fallthru
      _
  $region6: #{token_embedding_forward.1} parent=0 // loop_footer
    %s12 = sadd.s32 1, %s8
  $region7: #{token_embedding_forward.1} parent=0 // loop_footer_branch
    %7 = sbr.rel target = $region3
  $region8: #{token_embedding_forward.1} parent=0 // loop_exit
    _

</llo_original>
